<compile_context>
chip_gen: v7x
topology: tpu7x:2x2x1
jax: 0.10.0
libtpu: 0.0.40
codegen_flags: <defaults>
</compile_context>

<pallas_src>
import math

import jax
import jax.numpy as jnp
from jax import lax
from jax.experimental import pallas as pl
from jax.experimental.pallas import tpu as pltpu


def _round_up(x, m):
    return ((x + m - 1) // m) * m


def _vmem_budget_bytes():
    """Generation-aware (per-TensorCore) VMEM budget with headroom for Mosaic internal
    scratch and output buffers, plus a suggested row-block cap."""
    cap = 64 * 1024 * 1024  # conservative default (v7x-class per-TC VMEM)
    try:
        info = pltpu.get_tpu_info()
        cap = int(getattr(info, "vmem_capacity_bytes", cap))
    except Exception:
        pass
    if cap <= 64 * 1024 * 1024:
        # v7x: 64 MiB per TC; leave headroom instead of clamping at the physical limit.
        return min(cap, 56 * 1024 * 1024), 256
    # v5e / v6e: 128 MiB physical -> raise the cap and allow TM=512 row blocks.
    return min(cap, 112 * 1024 * 1024), 512


def _pick_block_rows(batch, d, itemsize, budget, cap_rows):
    """Largest TM (multiple of 8, <= cap_rows) whose working set fits the VMEM budget.
    The batch is zero-padded afterwards so TM always divides the padded half."""

    def fits(tm):
        bp = _round_up(batch, tm)
        n = 2 * bp
        # resident zn (single-buffered) + (TM,N) f32 sim/exp temporaries
        # + f32 LHS/partner row blocks + slack.
        est = n * d * itemsize + 3 * tm * n * 4 + 4 * tm * d * 4 + (2 << 20)
        return est <= budget

    tm = max(8, min(int(cap_rows), _round_up(batch, 8)))
    tm = (tm // 8) * 8
    while tm > 8 and not fits(tm):
        tm -= 8
    # Snap to an MXU-friendly multiple when large (256 on v6e/v7x, 128 on v5e).
    for align in (256, 128):
        if tm >= align:
            tm = (tm // align) * align
            break
    return max(tm, 8)


def _make_ntxent_kernel(N, Bp, B, TM, inv_temp):
    nb = N // TM
    pshift = Bp // TM                 # partner offset, in blocks
    pad_cols = 2 * (Bp - B)           # number of zero-padded rows/columns (exact zeros)
    # Padded rows are exact zero vectors -> their similarity to anything is exactly 0
    # (in any matmul precision), so every row's exp-sum contains the exact constant
    # pad_cols * exp((0 - 1)/T); subtract it analytically.
    pad_corr = float(pad_cols) * math.exp(-inv_temp)

    def kernel(zn_ref, o_ref):
        m_idx = pl.program_id(0)
        row0 = pl.multiple_of(m_idx * TM, TM)

        # LHS row block: aligned slice of the already-resident zn (no extra HBM traffic).
        q = zn_ref[pl.ds(row0, TM), :]                        # (TM, D), matmul dtype
        qf = q.astype(jnp.float32)

        # (TM, N) similarity slice on the MXU, contracting the feature axis of both
        # operands directly (A @ B.T form, no explicit (D, N) transpose of the RHS).
        sim = lax.dot_general(
            q, zn_ref[...],
            dimension_numbers=(((1,), (1,)), ((), ())),
            preferred_element_type=jnp.float32)               # (TM, N) f32

        # Diagonal-free logsumexp with the constant bound 1/T (unit-norm rows => sim<=1):
        # no per-row max pass; temperature fused into the exp argument, which stays in
        # [-2/T, 0] so exp never overflows.
        ssum = jnp.sum(jnp.exp((sim - 1.0) * inv_temp), axis=1, keepdims=True)
        # Remove self-similarity analytically. diag is recomputed on the VPU from the
        # same operand values the MXU consumed; with bf16 operands the products are
        # exact in f32 and only the accumulation order differs (ULP-level residual).
        diag = jnp.sum(qf * qf, axis=1, keepdims=True)        # == sim[i, i]
        ssum = ssum - jnp.exp((diag - 1.0) * inv_temp)
        if pad_cols:
            ssum = ssum - pad_corr
        lse = inv_temp + jnp.log(ssum)                        # (TM, 1)

        # Positive logit sim[i, (i+Bp)%N] / T via the partner row block, an aligned
        # contiguous slice of the resident zn (O(TM*D) work, not an O(TM*N) masked scan).
        pblk = (m_idx + pshift) % nb
        p0 = pl.multiple_of(pblk * TM, TM)
        pf = zn_ref[pl.ds(p0, TM), :].astype(jnp.float32)
        pos = jnp.sum(qf * pf, axis=1, keepdims=True) * inv_temp

        per_row = lse - pos
        if pad_cols:
            # Exclude the zero-padded rows from the partial sum.
            rows = row0 + lax.broadcasted_iota(jnp.int32, (TM, 1), 0)
            real = (rows < B) | ((rows >= Bp) & (rows < Bp + B))
            per_row = jnp.where(real, per_row, 0.0)
        partial = jnp.sum(per_row)

        # Lane-dense (1, 8, 128) partial-sum slab -> unmasked vector stores.
        o_ref[...] = jnp.full((1, 8, 128), partial, dtype=jnp.float32)

    return kernel


def ntxent_loss(z_i, z_j, temp=0.5, *, matmul_dtype=jnp.bfloat16, block_rows=None):
    """NT-Xent loss, equivalent to torchssl NTXentLoss.forward.

    matmul_dtype=bfloat16 is the production default on v5e/v6e/v7x (f32 accumulation on
    the MXU). float32 operands are test-only: on v7x they are emulated via multi-pass
    bf16 at >=3x the MXU cost. block_rows overrides the auto row-block cap.
    """
    assert z_i.shape == z_j.shape and z_i.ndim == 2
    batch, d = z_i.shape
    n_real = 2 * batch
    inv_temp = 1.0 / float(temp)
    itemsize = jnp.dtype(matmul_dtype).itemsize

    budget, cap_rows = _vmem_budget_bytes()
    if block_rows is not None:
        cap_rows = int(block_rows)
    tm = _pick_block_rows(batch, d, itemsize, budget, cap_rows)

    # Zero-pad each half so TM always divides the padded half Bp (tiled path always
    # taken; the old O(N^2) single-block fallback is removed). Padded rows stay exact
    # zeros through normalization and are handled analytically inside the kernel.
    bp = _round_up(batch, tm)
    if bp != batch:
        pad = jnp.zeros((bp - batch, d), dtype=z_i.dtype)
        z_i = jnp.concatenate([z_i, pad], axis=0)
        z_j = jnp.concatenate([z_j, pad], axis=0)
    n = 2 * bp
    nb = n // tm

    # Concatenate + L2-normalize once in plain XLA (O(N*D), negligible vs the O(N^2*D)
    # kernel). Normalization stays f32; only the MXU operands are downcast.
    z = jnp.concatenate([z_i, z_j], axis=0).astype(jnp.float32)
    norm = jnp.sqrt(jnp.sum(z * z, axis=1, keepdims=True))
    zn = (z / jnp.maximum(norm, 1e-12)).astype(matmul_dtype)

    # VMEM budget: resident zn (single-buffered) + (TM, N) f32 temporaries + row blocks.
    est = n * d * itemsize + 3 * tm * n * 4 + 4 * tm * d * 4 + (2 << 20)
    vmem_limit = int(min(budget, max(est, 32 * 1024 * 1024)))

    cost = pl.CostEstimate(
        flops=2 * n * n * d,
        transcendentals=n * n,
        bytes_accessed=n * d * itemsize + nb * 8 * 128 * 4)

    kernel = _make_ntxent_kernel(n, bp, batch, tm, inv_temp)

    def call(single_buffer_rhs):
        rhs_kwargs = {}
        if single_buffer_rhs:
            # Constant index_map -> double buffering buys nothing; halve zn residency.
            rhs_kwargs["pipeline_mode"] = pl.Buffered(1)
        return pl.pallas_call(
            kernel,
            out_shape=jax.ShapeDtypeStruct((nb, 8, 128), jnp.float32),
            grid_spec=pltpu.PrefetchScalarGridSpec(
                num_scalar_prefetch=0,
                grid=(nb,),
                in_specs=[pl.BlockSpec((n, d), lambda m: (0, 0), **rhs_kwargs)],
                out_specs=pl.BlockSpec((1, 8, 128), lambda m: (m, 0, 0)),
            ),
            compiler_params=pltpu.CompilerParams(
                dimension_semantics=("parallel",),
                vmem_limit_bytes=vmem_limit,
            ),
            cost_estimate=cost,
        )(zn)

    try:
        out = call(True)
    except Exception:
        # Toolchains that reject Buffered(1) fall back to the default double-buffered
        # resident input (identical math, slightly more VMEM).
        out = call(False)

    return jnp.sum(out[:, 0, 0]) / jnp.float32(n_real)


def _ntxent_ref(z_i, z_j, temp=0.5):
    """Plain-JAX reference mirroring the PyTorch code path."""
    b = z_i.shape[0]
    z = jnp.concatenate([z_i, z_j], axis=0).astype(jnp.float32)
    zn = z / jnp.maximum(jnp.linalg.norm(z, axis=1, keepdims=True), 1e-12)
    sim = jnp.matmul(zn, zn.T, precision=lax.Precision.HIGHEST) / temp
    n = 2 * b
    idx = jnp.arange(n)
    pos = sim[idx, (idx + b) % n]
    sim_masked = jnp.where(jnp.eye(n, dtype=bool), -jnp.inf, sim)
    lse = jax.scipy.special.logsumexp(sim_masked, axis=1)
    return jnp.sum(lse - pos) / n


if __name__ == "__main__":
    key = jax.random.PRNGKey(0)
    k1, k2, k3, k4, k5, k6 = jax.random.split(key, 6)

    # 1) Small, non-8-divisible batch (exercises the zero-padding path: TM=8, pad=4/half).
    B, D = 4, 32
    z_i = jax.random.normal(k1, (B, D), dtype=jnp.float32)
    z_j = jax.random.normal(k2, (B, D), dtype=jnp.float32)
    ref = jax.block_until_ready(_ntxent_ref(z_i, z_j, 0.5))

    loss_f32 = jax.block_until_ready(
        ntxent_loss(z_i, z_j, 0.5, matmul_dtype=jnp.float32))
    assert jnp.allclose(loss_f32, ref, rtol=1.5e-4, atol=1.5e-4), (loss_f32, ref)

    loss_bf16 = jax.block_until_ready(ntxent_loss(z_i, z_j, 0.5))  # bf16 MXU operands
    assert jnp.allclose(loss_bf16, ref, rtol=2e-2, atol=2e-2), (loss_bf16, ref)

    # 2) Larger, evenly tiled batch (multi-block path, no padding: TM=32, 4 blocks).
    B2, D2 = 64, 64
    z_i2 = jax.random.normal(k3, (B2, D2), dtype=jnp.float32)
    z_j2 = jax.random.normal(k4, (B2, D2), dtype=jnp.float32)
    ref2 = jax.block_until_ready(_ntxent_ref(z_i2, z_j2, 0.5))

    loss2_f32 = jax.block_until_ready(
        ntxent_loss(z_i2, z_j2, 0.5, matmul_dtype=jnp.float32, block_rows=32))
    assert jnp.allclose(loss2_f32, ref2, rtol=1.5e-4, atol=1.5e-4), (loss2_f32, ref2)

    loss2_bf16 = jax.block_until_ready(ntxent_loss(z_i2, z_j2, 0.5, block_rows=32))
    assert jnp.allclose(loss2_bf16, ref2, rtol=2e-2, atol=2e-2), (loss2_bf16, ref2)

    # 3) Awkward batch with multiple blocks (padding + multi-block: TM=16, Bp=32, pad=8/half).
    B3, D3 = 24, 32
    z_i3 = jax.random.normal(k5, (B3, D3), dtype=jnp.float32)
    z_j3 = jax.random.normal(k6, (B3, D3), dtype=jnp.float32)
    ref3 = jax.block_until_ready(_ntxent_ref(z_i3, z_j3, 0.5))

    loss3_f32 = jax.block_until_ready(
        ntxent_loss(z_i3, z_j3, 0.5, matmul_dtype=jnp.float32, block_rows=16))
    assert jnp.allclose(loss3_f32, ref3, rtol=1.5e-4, atol=1.5e-4), (loss3_f32, ref3)

    loss3_bf16 = jax.block_until_ready(ntxent_loss(z_i3, z_j3, 0.5, block_rows=16))
    assert jnp.allclose(loss3_bf16, ref3, rtol=2e-2, atol=2e-2), (loss3_bf16, ref3)

    print("KERNEL_OK")
</pallas_src>

<mosaic_0001>
module attributes {stable_mosaic.version = 11 : i64} {
  func.func @kernel(%arg0: i32, %arg1: memref<16x32xf32, #tpu.memory_space<vmem>>, %arg2: memref<1x8x128xf32, #tpu.memory_space<vmem>>) attributes {dimension_semantics = [#tpu.dimension_semantics<parallel>], iteration_bounds = array<i64: 2>, scalar_prefetch = 0 : i64, scratch_operands = 0 : i64, tpu.core_type = #tpu.core_type<tc>, window_params = [{pipeline_mode = #tpu.pipeline_mode<synchronous>, transform_indices = @transform_0, window_bounds = array<i64: 16, 32>}, {transform_indices = @transform_1, window_bounds = array<i64: 1, 8, 128>}]} {
    %c8_i32 = arith.constant 8 : i32
    %0 = arith.muli %arg0, %c8_i32 : i32
    %1 = tpu.assume_multiple %0, 8 : i32
    %2 = arith.index_cast %1 : i32 to index
    %c0 = arith.constant 0 : index
    %3 = vector.load %arg1[%2, %c0] : memref<16x32xf32, #tpu.memory_space<vmem>>, vector<8x32xf32>
    %c0_0 = arith.constant 0 : index
    %c0_1 = arith.constant 0 : index
    %4 = vector.load %arg1[%c0_0, %c0_1] : memref<16x32xf32, #tpu.memory_space<vmem>>, vector<16x32xf32>
    %cst = arith.constant dense<0.000000e+00> : vector<8x16xf32>
    %5 = tpu.matmul %3, %4, %cst {dimension_numbers = #tpu.dot_dimension_numbers<[1], [1], [0], [0], [0, 0, 1, 0], [], []>} : vector<8x32xf32>, vector<16x32xf32>, vector<8x16xf32> -> vector<8x16xf32>
    %cst_2 = arith.constant 1.000000e+00 : f32
    %6 = vector.broadcast %cst_2 : f32 to vector<8x16xf32>
    %7 = arith.subf %5, %6 : vector<8x16xf32>
    %cst_3 = arith.constant 2.000000e+00 : f32
    %8 = vector.broadcast %cst_3 : f32 to vector<8x16xf32>
    %9 = arith.mulf %7, %8 : vector<8x16xf32>
    %10 = math.exp %9 : vector<8x16xf32>
    %cst_4 = arith.constant dense<0.000000e+00> : vector<8xf32>
    %11 = vector.multi_reduction <add>, %10, %cst_4 [1] : vector<8x16xf32> to vector<8xf32>
    %12 = vector.shape_cast %11 : vector<8xf32> to vector<8x1xf32>
    %13 = arith.mulf %3, %3 : vector<8x32xf32>
    %cst_5 = arith.constant dense<0.000000e+00> : vector<8xf32>
    %14 = vector.multi_reduction <add>, %13, %cst_5 [1] : vector<8x32xf32> to vector<8xf32>
    %15 = vector.shape_cast %14 : vector<8xf32> to vector<8x1xf32>
    %cst_6 = arith.constant 1.000000e+00 : f32
    %16 = vector.broadcast %cst_6 : f32 to vector<8x1xf32>
    %17 = arith.subf %15, %16 : vector<8x1xf32>
    %cst_7 = arith.constant 2.000000e+00 : f32
    %18 = vector.broadcast %cst_7 : f32 to vector<8x1xf32>
    %19 = arith.mulf %17, %18 : vector<8x1xf32>
    %20 = math.exp %19 : vector<8x1xf32>
    %21 = arith.subf %12, %20 : vector<8x1xf32>
    %cst_8 = arith.constant 1.08268225 : f32
    %22 = vector.broadcast %cst_8 : f32 to vector<8x1xf32>
    %23 = arith.subf %21, %22 : vector<8x1xf32>
    %24 = math.log %23 : vector<8x1xf32>
    %cst_9 = arith.constant 2.000000e+00 : f32
    %25 = vector.broadcast %cst_9 : f32 to vector<8x1xf32>
    %26 = arith.addf %25, %24 : vector<8x1xf32>
    %c1_i32 = arith.constant 1 : i32
    %27 = arith.addi %arg0, %c1_i32 : i32
    %c2_i32 = arith.constant 2 : i32
    %c0_i32 = arith.constant 0 : i32
    %28 = arith.cmpi eq, %c2_i32, %c0_i32 : i32
    %c1_i32_10 = arith.constant 1 : i32
    %29 = arith.select %28, %c1_i32_10, %c2_i32 : i32
    %30 = arith.remsi %27, %29 : i32
    %c0_i32_11 = arith.constant 0 : i32
    %31 = arith.cmpi ne, %30, %c0_i32_11 : i32
    %c0_i32_12 = arith.constant 0 : i32
    %32 = arith.cmpi slt, %30, %c0_i32_12 : i32
    %c0_i32_13 = arith.constant 0 : i32
    %33 = arith.cmpi slt, %29, %c0_i32_13 : i32
    %34 = arith.xori %32, %33 : i1
    %35 = arith.andi %34, %31 : i1
    %36 = arith.addi %30, %29 : i32
    %37 = arith.select %35, %36, %30 : i32
    %c8_i32_14 = arith.constant 8 : i32
    %38 = arith.muli %37, %c8_i32_14 : i32
    %39 = tpu.assume_multiple %38, 8 : i32
    %40 = arith.index_cast %39 : i32 to index
    %c0_15 = arith.constant 0 : index
    %41 = vector.load %arg1[%40, %c0_15] : memref<16x32xf32, #tpu.memory_space<vmem>>, vector<8x32xf32>
    %42 = arith.mulf %3, %41 : vector<8x32xf32>
    %cst_16 = arith.constant dense<0.000000e+00> : vector<8xf32>
    %43 = vector.multi_reduction <add>, %42, %cst_16 [1] : vector<8x32xf32> to vector<8xf32>
    %44 = vector.shape_cast %43 : vector<8xf32> to vector<8x1xf32>
    %cst_17 = arith.constant 2.000000e+00 : f32
    %45 = vector.broadcast %cst_17 : f32 to vector<8x1xf32>
    %46 = arith.mulf %44, %45 : vector<8x1xf32>
    %47 = arith.subf %26, %46 : vector<8x1xf32>
    %48 = tpu.iota {dimensions = array<i32: 0>} : vector<8x1xi32>
    %49 = vector.broadcast %1 : i32 to vector<8x1xi32>
    %50 = arith.addi %49, %48 : vector<8x1xi32>
    %c4_i32 = arith.constant 4 : i32
    %51 = vector.broadcast %c4_i32 : i32 to vector<8x1xi32>
    %52 = arith.cmpi slt, %50, %51 : vector<8x1xi32>
    %c8_i32_18 = arith.constant 8 : i32
    %53 = vector.broadcast %c8_i32_18 : i32 to vector<8x1xi32>
    %54 = arith.cmpi sge, %50, %53 : vector<8x1xi32>
    %c12_i32 = arith.constant 12 : i32
    %55 = vector.broadcast %c12_i32 : i32 to vector<8x1xi32>
    %56 = arith.cmpi slt, %50, %55 : vector<8x1xi32>
    %57 = arith.andi %54, %56 : vector<8x1xi1>
    %58 = arith.ori %52, %57 : vector<8x1xi1>
    %cst_19 = arith.constant 0.000000e+00 : f32
    %59 = vector.broadcast %cst_19 : f32 to vector<8x1xf32>
    %60 = arith.select %58, %47, %59 : vector<8x1xi1>, vector<8x1xf32>
    %61 = vector.shape_cast %60 : vector<8x1xf32> to vector<1x8x1xf32>
    %cst_20 = arith.constant dense<0.000000e+00> : vector<1xf32>
    %62 = vector.multi_reduction <add>, %61, %cst_20 [1, 2] : vector<1x8x1xf32> to vector<1xf32>
    %63 = vector.shape_cast %62 : vector<1xf32> to vector<1x1x1xf32>
    %64 = vector.extract %63[0, 0, 0] : f32 from vector<1x1x1xf32>
    %65 = vector.broadcast %64 : f32 to vector<1x8x128xf32>
    %c0_21 = arith.constant 0 : index
    %c0_22 = arith.constant 0 : index
    %c0_23 = arith.constant 0 : index
    %66 = vector.load %arg2[%c0_21, %c0_22, %c0_23] : memref<1x8x128xf32, #tpu.memory_space<vmem>>, vector<1x8x128xf32>
    tpu.vector_store %arg2[%c0_21, %c0_22, %c0_23], %65 {strides = array<i32>} : memref<1x8x128xf32, #tpu.memory_space<vmem>>, vector<1x8x128xf32>,
    return
  }
  func.func @transform_0(%arg0: i32) -> (i32, i32) {
    %c0_i32 = arith.constant 0 : i32
    %c0_i32_0 = arith.constant 0 : i32
    %c0_i32_1 = arith.constant 0 : i32
    return %c0_i32, %c0_i32_0 : i32, i32
  }
  func.func @transform_1(%arg0: i32) -> (i32, i32, i32) {
    %c0_i32 = arith.constant 0 : i32
    %c0_i32_0 = arith.constant 0 : i32
    %c0_i32_1 = arith.constant 0 : i32
    return %arg0, %c0_i32, %c0_i32_0 : i32, i32, i32
  }
}

module attributes {stable_mosaic.version = 11 : i64} {
  func.func @kernel(%arg0: i32, %arg1: memref<16x32xf32, #tpu.memory_space<vmem>>, %arg2: memref<1x8x128xf32, #tpu.memory_space<vmem>>) attributes {dimension_semantics = [#tpu.dimension_semantics<parallel>], iteration_bounds = array<i64: 2>, scalar_prefetch = 0 : i64, scratch_operands = 0 : i64, tpu.core_type = #tpu.core_type<tc>, window_params = [{pipeline_mode = #tpu.pipeline_mode<synchronous>, transform_indices = @transform_0, window_bounds = array<i64: 16, 32>}, {transform_indices = @transform_1, window_bounds = array<i64: 1, 8, 128>}]} {
    %c8_i32 = arith.constant 8 : i32
    %0 = arith.muli %arg0, %c8_i32 : i32
    %1 = tpu.assume_multiple %0, 8 : i32
    %2 = arith.index_cast %1 : i32 to index
    %c0 = arith.constant 0 : index
    %3 = vector.load %arg1[%2, %c0] : memref<16x32xf32, #tpu.memory_space<vmem>>, vector<8x32xf32>
    %c0_0 = arith.constant 0 : index
    %c0_1 = arith.constant 0 : index
    %4 = vector.load %arg1[%c0_0, %c0_1] : memref<16x32xf32, #tpu.memory_space<vmem>>, vector<16x32xf32>
    %cst = arith.constant dense<0.000000e+00> : vector<8x16xf32>
    %5 = tpu.matmul %3, %4, %cst {dimension_numbers = #tpu.dot_dimension_numbers<[1], [1], [0], [0], [0, 0, 1, 0], [], []>} : vector<8x32xf32>, vector<16x32xf32>, vector<8x16xf32> -> vector<8x16xf32>
    %cst_2 = arith.constant 1.000000e+00 : f32
    %6 = vector.broadcast %cst_2 : f32 to vector<8x16xf32>
    %7 = arith.subf %5, %6 : vector<8x16xf32>
    %cst_3 = arith.constant 2.000000e+00 : f32
    %8 = vector.broadcast %cst_3 : f32 to vector<8x16xf32>
    %9 = arith.mulf %7, %8 : vector<8x16xf32>
    %10 = math.exp %9 : vector<8x16xf32>
    %cst_4 = arith.constant dense<0.000000e+00> : vector<8xf32>
    %11 = vector.multi_reduction <add>, %10, %cst_4 [1] : vector<8x16xf32> to vector<8xf32>
    %12 = vector.shape_cast %11 : vector<8xf32> to vector<8x1xf32>
    %13 = arith.mulf %3, %3 : vector<8x32xf32>
    %cst_5 = arith.constant dense<0.000000e+00> : vector<8xf32>
    %14 = vector.multi_reduction <add>, %13, %cst_5 [1] : vector<8x32xf32> to vector<8xf32>
    %15 = vector.shape_cast %14 : vector<8xf32> to vector<8x1xf32>
    %cst_6 = arith.constant 1.000000e+00 : f32
    %16 = vector.broadcast %cst_6 : f32 to vector<8x1xf32>
    %17 = arith.subf %15, %16 : vector<8x1xf32>
    %cst_7 = arith.constant 2.000000e+00 : f32
    %18 = vector.broadcast %cst_7 : f32 to vector<8x1xf32>
    %19 = arith.mulf %17, %18 : vector<8x1xf32>
    %20 = math.exp %19 : vector<8x1xf32>
    %21 = arith.subf %12, %20 : vector<8x1xf32>
    %cst_8 = arith.constant 1.08268225 : f32
    %22 = vector.broadcast %cst_8 : f32 to vector<8x1xf32>
    %23 = arith.subf %21, %22 : vector<8x1xf32>
    %24 = math.log %23 : vector<8x1xf32>
    %cst_9 = arith.constant 2.000000e+00 : f32
    %25 = vector.broadcast %cst_9 : f32 to vector<8x1xf32>
    %26 = arith.addf %25, %24 : vector<8x1xf32>
    %c1_i32 = arith.constant 1 : i32
    %27 = arith.addi %arg0, %c1_i32 : i32
    %c2_i32 = arith.constant 2 : i32
    %c0_i32 = arith.constant 0 : i32
    %28 = arith.cmpi eq, %c2_i32, %c0_i32 : i32
    %c1_i32_10 = arith.constant 1 : i32
    %29 = arith.select %28, %c1_i32_10, %c2_i32 : i32
    %30 = arith.remsi %27, %29 : i32
    %c0_i32_11 = arith.constant 0 : i32
    %31 = arith.cmpi ne, %30, %c0_i32_11 : i32
    %c0_i32_12 = arith.constant 0 : i32
    %32 = arith.cmpi slt, %30, %c0_i32_12 : i32
    %c0_i32_13 = arith.constant 0 : i32
    %33 = arith.cmpi slt, %29, %c0_i32_13 : i32
    %34 = arith.xori %32, %33 : i1
    %35 = arith.andi %34, %31 : i1
    %36 = arith.addi %30, %29 : i32
    %37 = arith.select %35, %36, %30 : i32
    %c8_i32_14 = arith.constant 8 : i32
    %38 = arith.muli %37, %c8_i32_14 : i32
    %39 = tpu.assume_multiple %38, 8 : i32
    %40 = arith.index_cast %39 : i32 to index
    %c0_15 = arith.constant 0 : index
    %41 = vector.load %arg1[%40, %c0_15] : memref<16x32xf32, #tpu.memory_space<vmem>>, vector<8x32xf32>
    %42 = arith.mulf %3, %41 : vector<8x32xf32>
    %cst_16 = arith.constant dense<0.000000e+00> : vector<8xf32>
    %43 = vector.multi_reduction <add>, %42, %cst_16 [1] : vector<8x32xf32> to vector<8xf32>
    %44 = vector.shape_cast %43 : vector<8xf32> to vector<8x1xf32>
    %cst_17 = arith.constant 2.000000e+00 : f32
    %45 = vector.broadcast %cst_17 : f32 to vector<8x1xf32>
    %46 = arith.mulf %44, %45 : vector<8x1xf32>
    %47 = arith.subf %26, %46 : vector<8x1xf32>
    %48 = tpu.iota {dimensions = array<i32: 0>} : vector<8x1xi32>
    %49 = vector.broadcast %1 : i32 to vector<8x1xi32>
    %50 = arith.addi %49, %48 : vector<8x1xi32>
    %c4_i32 = arith.constant 4 : i32
    %51 = vector.broadcast %c4_i32 : i32 to vector<8x1xi32>
    %52 = arith.cmpi slt, %50, %51 : vector<8x1xi32>
    %c8_i32_18 = arith.constant 8 : i32
    %53 = vector.broadcast %c8_i32_18 : i32 to vector<8x1xi32>
    %54 = arith.cmpi sge, %50, %53 : vector<8x1xi32>
    %c12_i32 = arith.constant 12 : i32
    %55 = vector.broadcast %c12_i32 : i32 to vector<8x1xi32>
    %56 = arith.cmpi slt, %50, %55 : vector<8x1xi32>
    %57 = arith.andi %54, %56 : vector<8x1xi1>
    %58 = arith.ori %52, %57 : vector<8x1xi1>
    %cst_19 = arith.constant 0.000000e+00 : f32
    %59 = vector.broadcast %cst_19 : f32 to vector<8x1xf32>
    %60 = arith.select %58, %47, %59 : vector<8x1xi1>, vector<8x1xf32>
    %61 = vector.shape_cast %60 : vector<8x1xf32> to vector<1x8x1xf32>
    %cst_20 = arith.constant dense<0.000000e+00> : vector<1xf32>
    %62 = vector.multi_reduction <add>, %61, %cst_20 [1, 2] : vector<1x8x1xf32> to vector<1xf32>
    %63 = vector.shape_cast %62 : vector<1xf32> to vector<1x1x1xf32>
    %64 = vector.extract %63[0, 0, 0] : f32 from vector<1x1x1xf32>
    %65 = vector.broadcast %64 : f32 to vector<1x8x128xf32>
    %c0_21 = arith.constant 0 : index
    %c0_22 = arith.constant 0 : index
    %c0_23 = arith.constant 0 : index
    %66 = vector.load %arg2[%c0_21, %c0_22, %c0_23] : memref<1x8x128xf32, #tpu.memory_space<vmem>>, vector<1x8x128xf32>
    tpu.vector_store %arg2[%c0_21, %c0_22, %c0_23], %65 {strides = array<i32>} : memref<1x8x128xf32, #tpu.memory_space<vmem>>, vector<1x8x128xf32>,
    return
  }
  func.func @transform_0(%arg0: i32) -> (i32, i32) {
    %c0_i32 = arith.constant 0 : i32
    %c0_i32_0 = arith.constant 0 : i32
    %c0_i32_1 = arith.constant 0 : i32
    return %c0_i32, %c0_i32_0 : i32, i32
  }
  func.func @transform_1(%arg0: i32) -> (i32, i32, i32) {
    %c0_i32 = arith.constant 0 : i32
    %c0_i32_0 = arith.constant 0 : i32
    %c0_i32_1 = arith.constant 0 : i32
    return %arg0, %c0_i32, %c0_i32_0 : i32, i32, i32
  }
}

</mosaic_0001>

<llo_original>
// kernel: tpu_custom_call.1
$region0: #{tpu_custom_call.1}
  #allocation0 [shape = 'u32[]', space=smem, size = 0x4, offset = 0x4, fixed_abs, tag = 'smem constant byte address 0x4 - core index']
  #allocation1 [shape = 'u32[144,128]{1,0:T(1,128)}', space=vmem, size = 0x12000, scoped, tag = 'internal scratch']
  %s0 = inlined_call_operand.hbm [shape: f32[16,32], index: 0, kind: input, shape index: {}]
  %s1 = inlined_call_operand.hbm [shape: f32[2,8,128], index: 1, kind: output, shape index: {}]
  %s2 = sld [smem:[#allocation0]]
  $region41: #{tpu_custom_call.1} parent=0
    _
  %s4 = ssub.s32 1, %s2
  %s5 = scalar_select 0, %s4, %s2
  $region1: #{tpu_custom_call.1} parent=0
    #allocation2 [shape = 'u8[8192]{0}', space=vmem, size = 0x2000, scoped, tag = 'input window, operand 0, single buffered']
    #allocation3 [shape = 's32[2]{0}', space=sflag, size = 0x8, scoped, tag = 'scoped memory for tpu_custom_call.1']
    #allocation4 [shape = 's32[2]{0}', space=sflag, size = 0x8, scoped, tag = 'scoped memory for tpu_custom_call.1']
    #allocation5 [shape = 'u8[8192]{0}', space=vmem, size = 0x2000, scoped, tag = 'output window, operand 0']
    %6 = vsyncpa [#allocation3], 0
    %7 = vsyncpa [#allocation4], 0
    %s8 = scalar_lea.sflag [#allocation4], 1
    %9 = vsyncpa %s8, 0
    loop: start=0, step=1, limit=4
    $region2: #{tpu_custom_call.1} parent=1 // loop_pre_header
      _
    $region3: #{tpu_custom_call.1} parent=1 // loop_header
      %s11 = sphi 0, %s15
      %p12 = scmp.ge.s32.totalorder %s11, 4
      %s19 = sphi 0, %s19
      %s21 = sphi 0, %s19
      %s22 = sphi 0, %s21
      %s36 = sphi 0, %s22
      %s42 = sphi 0, %s44
      %s45 = sphi 0, %s42
      %s46 = sphi 0, %s45
      %s62 = sphi 0, %s46
    $region4: #{tpu_custom_call.1} parent=1 // loop_header_branch
      %14 = sbr.rel (%p12) target = $region8
    $region5: #{tpu_custom_call.1} parent=1 // loop_body
      %s16 = ssub.s32 %s11, 1
      %s17 = ssub.s32 %s11, 2
      %s18 = sadd.s32 %s11, 1
      %s20 = sadd.s32 %s19, 1
      %p23 = scmp.eq.s32.totalorder %s11, 1
      %p24 = scmp.ne.s32.totalorder %s19, %s21
      %p25 = scmp.eq.s32.totalorder %s11, 0
      %p26 = por %p24, %p25
      %p27 = scmp.ne.s32.totalorder %s19, %s21
      %p28 = scmp.eq.s32.totalorder %s16, 1
      %p29 = por %p27, %p28
      %p30 = scmp.ne.s32.totalorder %s21, %s22
      %p31 = scmp.eq.s32.totalorder %s16, 0
      %p32 = por %p30, %p31
      %p33 = scmp.ne.s32.totalorder %s21, %s22
      %p34 = scmp.eq.s32.totalorder %s17, 1
      %p35 = por %p33, %p34
      %p37 = scmp.ne.s32.totalorder %s22, %s36
      %p38 = scmp.eq.s32.totalorder %s17, 0
      %p39 = por %p37, %p38
      %s40 = ssub.s32 %s11, %s18
      %p41 = scmp.eq.s32.totalorder %s40, 0
      %s43 = sadd.s32 %s42, 1
      %s44 = scalar_select %p41, %s42, %s43
      %p47 = pneg %p41
      %p48 = scmp.eq.s32.totalorder %s11, 1
      %p49 = por %p47, %p48
      %p50 = scmp.ne.s32.totalorder %s42, %s45
      %p51 = scmp.eq.s32.totalorder %s11, 0
      %p52 = por %p50, %p51
      %p53 = scmp.ne.s32.totalorder %s42, %s45
      %p54 = scmp.eq.s32.totalorder %s16, 1
      %p55 = por %p53, %p54
      %p56 = scmp.ne.s32.totalorder %s45, %s46
      %p57 = scmp.eq.s32.totalorder %s16, 0
      %p58 = por %p56, %p57
      %p59 = scmp.ne.s32.totalorder %s45, %s46
      %p60 = scmp.eq.s32.totalorder %s17, 1
      %p61 = por %p59, %p60
      %p63 = scmp.ne.s32.totalorder %s46, %s62
      %p64 = scmp.eq.s32.totalorder %s17, 0
      %p65 = por %p63, %p64
      %p66 = scmp.le.s32.totalorder 1, %s11
      %p67 = scmp.lt.s32.totalorder %s11, 3
      %p68 = pnand %p66, %p67
      %p69 = pneg %p68
      // Predicated region
      $region9: #{tpu_custom_call.1} parent=5 // pred_check
        _
      $region10: #{tpu_custom_call.1} parent=5 // pred_check_branch
        %71 = sbr.rel (%p68) target = $region12
      $region11: #{tpu_custom_call.1} parent=5 // pred_region
        %s72 = ssub.s32 %s11, 1
        // Predicated region
        $region13: #{tpu_custom_call.1} parent=11 // pred_check
          %p73 = pneg %p32
        $region14: #{tpu_custom_call.1} parent=11 // pred_check_branch
          %75 = sbr.rel (%p73) target = $region16
        $region15: #{tpu_custom_call.1} parent=11 // pred_region
          %s77 = ssub.s32 256, 256
          %78 = vsyncadd [#allocation3], %s77
          %s79 = sshll.u32 [#allocation2], 4
          %s80 = int_to_ptr.vmem [resolvable:$true] %s79
          %85 = dma.hbm_to_vmem [thread:$0]  %s0, 256, %s80, [#allocation3], 128, 128, 8
        $region16: #{tpu_custom_call.1} parent=11 // pred_fallthru
          _
      $region12: #{tpu_custom_call.1} parent=5 // pred_fallthru
        _
      %p86 = scmp.lt.s32.totalorder %s11, 2
      // Predicated region
      $region17: #{tpu_custom_call.1} parent=5 // pred_check
        %p87 = pneg %p86
      $region18: #{tpu_custom_call.1} parent=5 // pred_check_branch
        %89 = sbr.rel (%p87) target = $region20
      $region19: #{tpu_custom_call.1} parent=5 // pred_region
        _
      $region20: #{tpu_custom_call.1} parent=5 // pred_fallthru
        _
      %p90 = scmp.le.s32.totalorder 1, %s11
      %p91 = scmp.lt.s32.totalorder %s11, 3
      %p92 = pnand %p90, %p91
      %p93 = pneg %p92
      // Predicated region
      $region21: #{tpu_custom_call.1} parent=5 // pred_check
        _
      $region22: #{tpu_custom_call.1} parent=5 // pred_check_branch
        %95 = sbr.rel (%p92) target = $region24
      $region23: #{tpu_custom_call.1} parent=5 // pred_region
        %s96 = ssub.s32 %s11, 1
        // Predicated region
        $region25: #{tpu_custom_call.1} parent=23 // pred_check
          %p97 = pneg %p32
        $region26: #{tpu_custom_call.1} parent=23 // pred_check_branch
          %99 = sbr.rel (%p97) target = $region28
        $region27: #{tpu_custom_call.1} parent=23 // pred_region
          %100 = dma.done [#allocation3], 256
        $region28: #{tpu_custom_call.1} parent=23 // pred_fallthru
          _
        %p101 = pneg %p32
        %p102 = pneg %p29
        %p103 = pneg %p58
        %p104 = pneg %p55
        %s105 = sand.u32 %s45, 1
        %s106 = scalar_lea.sflag [#allocation4], %s105
        %s107 = sand.u32 %s45, 1
        %s108 = smul.addr %s107, 8
        %s109 = scalar_lea.vmem [#allocation5], %s108
        %s110 = smul.u32 %s16, 8
        %s111 = scalar_lea.vmem [#allocation2], %s110
        %v112 = vld [vmem:[%s111] sm:$0xff]
        %v113 = vld [vmem:[#allocation2] sm:$0xff]
        %v114 = vld [vmem:[#allocation2 + $0x8] sm:$0xff]
        %vm115 = vcmask 261120
        %v117 = vsel %vm115, %v112, 0
        %v120 = vsel %vm115, %v113, 0
        %v123 = vsel %vm115, %v114, 0
        %125 = vmatprep.subr.mxu0 0.0
        %126 = vmatpush1.xpose.msra.mxu0 %v120
        %127 = vmatprep.subr.mxu0 0.0
        %128 = vmatpush1.xpose.msra.mxu0 %v123
        %129 = vmatprep.subr.mxu0 0.0
        %130 = vmatpush1.xpose.msra.mxu0 0.0
        %131 = vmatprep.subr.mxu0 0.0
        %132 = vmatpush1.xpose.msra.mxu0 0.0
        %133 = vmatprep.subr.mxu0 0.0
        %134 = vmatpush1.xpose.msra.mxu0 0.0
        %135 = vmatprep.subr.mxu0 0.0
        %136 = vmatpush1.xpose.msra.mxu0 0.0
        %137 = vmatprep.subr.mxu0 0.0
        %138 = vmatpush1.xpose.msra.mxu0 0.0
        %139 = vmatprep.subr.mxu0 0.0
        %140 = vmatpush1.xpose.msra.mxu0 0.0
        %141 = vmatprep.subr.mxu0 0.0
        %142 = vmatpush1.xpose.msra.mxu0 0.0
        %143 = vmatprep.subr.mxu0 0.0
        %144 = vmatpush1.xpose.msra.mxu0 0.0
        %145 = vmatprep.subr.mxu0 0.0
        %146 = vmatpush1.xpose.msra.mxu0 0.0
        %147 = vmatprep.subr.mxu0 0.0
        %148 = vmatpush1.xpose.msra.mxu0 0.0
        %149 = vmatprep.subr.mxu0 0.0
        %150 = vmatpush1.xpose.msra.mxu0 0.0
        %151 = vmatprep.subr.mxu0 0.0
        %152 = vmatpush1.xpose.msra.mxu0 0.0
        %153 = vmatprep.subr.mxu0 0.0
        %154 = vmatpush1.xpose.msra.mxu0 0.0
        %155 = vmatprep.subr.mxu0 0.0
        %156 = vmatpush1.xpose.msra.mxu0 0.0
        %157 = vmatprep.subr.mxu0 0.0
        %158 = vmatpush1.xpose.msra.mxu0 0.0
        %159 = vmatprep.subr.mxu0 0.0
        %160 = vmatpush1.xpose.msra.mxu0 0.0
        %161 = vmatprep.subr.mxu0 0.0
        %162 = vmatpush1.xpose.msra.mxu0 0.0
        %163 = vmatprep.subr.mxu0 0.0
        %164 = vmatpush1.xpose.msra.mxu0 0.0
        %165 = vmatprep.subr.mxu0 0.0
        %166 = vmatpush1.xpose.msra.mxu0 0.0
        %167 = vmatprep.subr.mxu0 0.0
        %168 = vmatpush1.xpose.msra.mxu0 0.0
        %169 = vmatprep.subr.mxu0 0.0
        %170 = vmatpush1.xpose.msra.mxu0 0.0
        %171 = vmatprep.subr.mxu0 0.0
        %172 = vmatpush1.xpose.msra.mxu0 0.0
        %173 = vmatprep.subr.mxu0 0.0
        %174 = vmatpush1.xpose.msra.mxu0 0.0
        %175 = vmatprep.subr.mxu0 0.0
        %176 = vmatpush1.xpose.msra.mxu0 0.0
        %177 = vmatprep.subr.mxu0 0.0
        %178 = vmatpush1.xpose.msra.mxu0 0.0
        %179 = vmatprep.subr.mxu0 0.0
        %180 = vmatpush1.xpose.msra.mxu0 0.0
        %181 = vmatprep.subr.mxu0 0.0
        %182 = vmatpush1.xpose.msra.mxu0 0.0
        %183 = vmatprep.subr.mxu0 0.0
        %184 = vmatpush1.xpose.msra.mxu0 0.0
        %185 = vmatprep.subr.mxu0 0.0
        %186 = vmatpush1.xpose.msra.mxu0 0.0
        %187 = vmatprep.subr.mxu0 0.0
        %188 = vmatpush1.xpose.msra.mxu0 0.0
        %189 = vmatprep.mubr.f32.mxu0 0.0
        %190 = vmatmul.mubr.f32.gmra.mrb[0].mxu0 %v117
        %v191 = vpop.f32.mrb[0].mxu0
        %v192 = vadd.f32 0.0, %v191
        %v193 = vpop.f32.mrb[0].mxu0
        %194 = vdwg.mxu0
        %v195 = vsub.f32 %v192, 1.0
        %v196 = vmul.f32 %v195, 2.0
        %v197 = vmul.f32 %v196, 1.442695
        %v198 = vpow.pop %v197
        %vm199 = vcmask 130048
        %v200 = vsel %vm199, %v198, 0.0
        %201 = vadd.xlane.f32.xlu0 %v200
        %v202 = vpop.xlane.xlu0 %201
        %v203 = vmul.f32 %v112, %v112
        %v204 = vsel %vm115, %v203, 0.0
        %205 = vadd.xlane.f32.xlu0 %v204
        %v206 = vpop.xlane.xlu0 %205
        %v207 = vsub.f32 %v206, 1.0
        %v208 = vmul.f32 %v207, 2.0
        %v209 = vmul.f32 %v208, 1.442695
        %v210 = vpow.pop %v209
        %v211 = vsub.f32 %v202, %v210
        %v212 = vsub.f32 %v211, 1.0826823
        %v213 = vlog2.pop %v212
        %v214 = vmul.f32 %v213, 0.6931472
        %v215 = vadd.f32 %v214, 2.0
        %s216 = sadd.s32 %s16, 1
        %p217 = scmp.lt.s32.totalorder %s216, 0
        %s218 = ssub.s32 0, %s216
        %s219 = scalar_select %p217, %s218, %s216
        %s220 = sand.u32 %s219, 1
        %s221 = ssub.s32 0, %s220
        %s222 = scalar_select %p217, %s221, %s220
        %p223 = scmp.ne.s32.totalorder %s222, 0
        %p224 = scmp.lt.s32.totalorder %s222, 0
        %p225 = pnand %p224, %p223
        %p226 = pneg %p225
        %s227 = sadd.s32 %s222, 2
        %s228 = scalar_select %p226, %s227, %s222
        %s229 = smul.u32 %s228, 8
        %s230 = scalar_lea.vmem [#allocation2], %s229
        %v231 = vld [vmem:[%s230] sm:$0xff]
        %v232 = vmul.f32 %v112, %v231
        %v233 = vsel %vm115, %v232, 0.0
        %234 = vadd.xlane.f32.xlu0 %v233
        %v235 = vpop.xlane.xlu0 %234
        %v236 = vmul.f32 %v235, 2.0
        %v237 = vsub.f32 %v215, %v236
        %v238 = vlaneseq
        %v239 = vshrl.u32 %v238, 7
        %v240 = vstv %s110
        %v241 = vadd.s32 %v240, %v239
        %vm242 = vcmp.lt.s32.totalorder %v241, 4
        %vm243 = vcmp.ge.s32.totalorder %v241, 8
        %vm244 = vcmp.lt.s32.totalorder %v241, 12
        %vm245 = vmand %vm243, %vm244
        %vm246 = vmor %vm242, %vm245
        %v247 = vsel %vm246, %v237, 0.0
        %vm248 = vcmask 7168
        %v249 = vsel %vm248, %v247, 0.0
        %250 = vadd.xlane.f32.xlu0 %v249
        %v251 = vpop.xlane.xlu0 %250
        %v252 = vrot.slane %v251, 4
        %v253 = vadd.f32 %v251, %v252
        %v254 = vrot.slane %v253, 2
        %v255 = vadd.f32 %v253, %v254
        %v256 = vrot.slane %v255, 1
        %v257 = vadd.f32 %v255, %v256
        %s258 = vtos %v257
        %v259 = vstv %s258
        %260 = vst [vmem:[%s109] sm:$0xff] %v259
        %s261 = sand.u32 %s45, 1
        %s262 = scalar_lea.sflag [#allocation4], %s261
        %s263 = sand.u32 %s45, 1
        %s264 = smul.addr %s263, 8
        %s265 = scalar_lea.vmem [#allocation5], %s264
        // Predicated region
        $region29: #{tpu_custom_call.1} parent=23 // pred_check
          %p266 = pneg %p55
        $region30: #{tpu_custom_call.1} parent=23 // pred_check_branch
          %268 = sbr.rel (%p266) target = $region32
        $region31: #{tpu_custom_call.1} parent=23 // pred_region
          %s270 = ssub.s32 128, 128
          %271 = vsyncadd %s262, %s270
          %s272 = smul.addr %s16, 128
          %s273 = scalar_lea.hbm %s1, %s272
          %s275 = sshll.u32 %s265, 4
          %s276 = int_to_ptr.vmem [resolvable:$true] %s275
          %278 = dma.vmem_to_hbm [thread:$0]  %s276, 128, %s273, %s262
        $region32: #{tpu_custom_call.1} parent=23 // pred_fallthru
          _
      $region24: #{tpu_custom_call.1} parent=5 // pred_fallthru
        _
      %p279 = scmp.le.s32.totalorder 2, %s11
      // Predicated region
      $region33: #{tpu_custom_call.1} parent=5 // pred_check
        %p280 = pneg %p279
      $region34: #{tpu_custom_call.1} parent=5 // pred_check_branch
        %282 = sbr.rel (%p280) target = $region36
      $region35: #{tpu_custom_call.1} parent=5 // pred_region
        %s283 = ssub.s32 %s11, 2
        // Predicated region
        $region37: #{tpu_custom_call.1} parent=35 // pred_check
          %p284 = pneg %p61
        $region38: #{tpu_custom_call.1} parent=35 // pred_check_branch
          %286 = sbr.rel (%p284) target = $region40
        $region39: #{tpu_custom_call.1} parent=35 // pred_region
          %s287 = sand.u32 %s46, 1
          %s288 = scalar_lea.sflag [#allocation4], %s287
          %s289 = sand.u32 %s46, 1
          %s290 = smul.addr %s289, 8
          %s291 = scalar_lea.vmem [#allocation5], %s290
          %292 = dma.done %s288, 128
        $region40: #{tpu_custom_call.1} parent=35 // pred_fallthru
          _
      $region36: #{tpu_custom_call.1} parent=5 // pred_fallthru
        _
    $region6: #{tpu_custom_call.1} parent=1 // loop_footer
      %s15 = sadd.s32 1, %s11
    $region7: #{tpu_custom_call.1} parent=1 // loop_footer_branch
      %10 = sbr.rel target = $region3
    $region8: #{tpu_custom_call.1} parent=1 // loop_exit
      _
    %293 = vsyncpa [#allocation3], 1
    %s294 = scalar_lea.sflag [#allocation3], 1
    %295 = vsyncpa %s294, 1
    %296 = vsyncpa [#allocation4], 1
    %s297 = scalar_lea.sflag [#allocation4], 1
    %298 = vsyncpa %s297, 1

// kernel: tpu_custom_call.1
$region0: #{tpu_custom_call.1}
  #allocation0 [shape = 'u32[]', space=smem, size = 0x4, offset = 0x4, fixed_abs, tag = 'smem constant byte address 0x4 - core index']
  #allocation1 [shape = 'u32[144,128]{1,0:T(1,128)}', space=vmem, size = 0x12000, scoped, tag = 'internal scratch']
  %s0 = inlined_call_operand.hbm [shape: f32[16,32], index: 0, kind: input, shape index: {}]
  %s1 = inlined_call_operand.hbm [shape: f32[2,8,128], index: 1, kind: output, shape index: {}]
  %s2 = sld [smem:[#allocation0]]
  $region41: #{tpu_custom_call.1} parent=0
    _
  %s4 = ssub.s32 1, %s2
  %s5 = scalar_select 0, %s4, %s2
  $region1: #{tpu_custom_call.1} parent=0
    #allocation2 [shape = 'u8[8192]{0}', space=vmem, size = 0x2000, scoped, tag = 'input window, operand 0, single buffered']
    #allocation3 [shape = 's32[2]{0}', space=sflag, size = 0x8, scoped, tag = 'scoped memory for tpu_custom_call.1']
    #allocation4 [shape = 's32[2]{0}', space=sflag, size = 0x8, scoped, tag = 'scoped memory for tpu_custom_call.1']
    #allocation5 [shape = 'u8[8192]{0}', space=vmem, size = 0x2000, scoped, tag = 'output window, operand 0']
    %6 = vsyncpa [#allocation3], 0
    %7 = vsyncpa [#allocation4], 0
    %s8 = scalar_lea.sflag [#allocation4], 1
    %9 = vsyncpa %s8, 0
    loop: start=0, step=1, limit=4
    $region2: #{tpu_custom_call.1} parent=1 // loop_pre_header
      _
    $region3: #{tpu_custom_call.1} parent=1 // loop_header
      %s11 = sphi 0, %s15
      %p12 = scmp.ge.s32.totalorder %s11, 4
      %s19 = sphi 0, %s19
      %s21 = sphi 0, %s19
      %s22 = sphi 0, %s21
      %s36 = sphi 0, %s22
      %s42 = sphi 0, %s44
      %s45 = sphi 0, %s42
      %s46 = sphi 0, %s45
      %s62 = sphi 0, %s46
    $region4: #{tpu_custom_call.1} parent=1 // loop_header_branch
      %14 = sbr.rel (%p12) target = $region8
    $region5: #{tpu_custom_call.1} parent=1 // loop_body
      %s16 = ssub.s32 %s11, 1
      %s17 = ssub.s32 %s11, 2
      %s18 = sadd.s32 %s11, 1
      %s20 = sadd.s32 %s19, 1
      %p23 = scmp.eq.s32.totalorder %s11, 1
      %p24 = scmp.ne.s32.totalorder %s19, %s21
      %p25 = scmp.eq.s32.totalorder %s11, 0
      %p26 = por %p24, %p25
      %p27 = scmp.ne.s32.totalorder %s19, %s21
      %p28 = scmp.eq.s32.totalorder %s16, 1
      %p29 = por %p27, %p28
      %p30 = scmp.ne.s32.totalorder %s21, %s22
      %p31 = scmp.eq.s32.totalorder %s16, 0
      %p32 = por %p30, %p31
      %p33 = scmp.ne.s32.totalorder %s21, %s22
      %p34 = scmp.eq.s32.totalorder %s17, 1
      %p35 = por %p33, %p34
      %p37 = scmp.ne.s32.totalorder %s22, %s36
      %p38 = scmp.eq.s32.totalorder %s17, 0
      %p39 = por %p37, %p38
      %s40 = ssub.s32 %s11, %s18
      %p41 = scmp.eq.s32.totalorder %s40, 0
      %s43 = sadd.s32 %s42, 1
      %s44 = scalar_select %p41, %s42, %s43
      %p47 = pneg %p41
      %p48 = scmp.eq.s32.totalorder %s11, 1
      %p49 = por %p47, %p48
      %p50 = scmp.ne.s32.totalorder %s42, %s45
      %p51 = scmp.eq.s32.totalorder %s11, 0
      %p52 = por %p50, %p51
      %p53 = scmp.ne.s32.totalorder %s42, %s45
      %p54 = scmp.eq.s32.totalorder %s16, 1
      %p55 = por %p53, %p54
      %p56 = scmp.ne.s32.totalorder %s45, %s46
      %p57 = scmp.eq.s32.totalorder %s16, 0
      %p58 = por %p56, %p57
      %p59 = scmp.ne.s32.totalorder %s45, %s46
      %p60 = scmp.eq.s32.totalorder %s17, 1
      %p61 = por %p59, %p60
      %p63 = scmp.ne.s32.totalorder %s46, %s62
      %p64 = scmp.eq.s32.totalorder %s17, 0
      %p65 = por %p63, %p64
      %p66 = scmp.le.s32.totalorder 1, %s11
      %p67 = scmp.lt.s32.totalorder %s11, 3
      %p68 = pnand %p66, %p67
      %p69 = pneg %p68
      // Predicated region
      $region9: #{tpu_custom_call.1} parent=5 // pred_check
        _
      $region10: #{tpu_custom_call.1} parent=5 // pred_check_branch
        %71 = sbr.rel (%p68) target = $region12
      $region11: #{tpu_custom_call.1} parent=5 // pred_region
        %s72 = ssub.s32 %s11, 1
        // Predicated region
        $region13: #{tpu_custom_call.1} parent=11 // pred_check
          %p73 = pneg %p32
        $region14: #{tpu_custom_call.1} parent=11 // pred_check_branch
          %75 = sbr.rel (%p73) target = $region16
        $region15: #{tpu_custom_call.1} parent=11 // pred_region
          %s77 = ssub.s32 256, 256
          %78 = vsyncadd [#allocation3], %s77
          %s79 = sshll.u32 [#allocation2], 4
          %s80 = int_to_ptr.vmem [resolvable:$true] %s79
          %85 = dma.hbm_to_vmem [thread:$0]  %s0, 256, %s80, [#allocation3], 128, 128, 8
        $region16: #{tpu_custom_call.1} parent=11 // pred_fallthru
          _
      $region12: #{tpu_custom_call.1} parent=5 // pred_fallthru
        _
      %p86 = scmp.lt.s32.totalorder %s11, 2
      // Predicated region
      $region17: #{tpu_custom_call.1} parent=5 // pred_check
        %p87 = pneg %p86
      $region18: #{tpu_custom_call.1} parent=5 // pred_check_branch
        %89 = sbr.rel (%p87) target = $region20
      $region19: #{tpu_custom_call.1} parent=5 // pred_region
        _
      $region20: #{tpu_custom_call.1} parent=5 // pred_fallthru
        _
      %p90 = scmp.le.s32.totalorder 1, %s11
      %p91 = scmp.lt.s32.totalorder %s11, 3
      %p92 = pnand %p90, %p91
      %p93 = pneg %p92
      // Predicated region
      $region21: #{tpu_custom_call.1} parent=5 // pred_check
        _
      $region22: #{tpu_custom_call.1} parent=5 // pred_check_branch
        %95 = sbr.rel (%p92) target = $region24
      $region23: #{tpu_custom_call.1} parent=5 // pred_region
        %s96 = ssub.s32 %s11, 1
        // Predicated region
        $region25: #{tpu_custom_call.1} parent=23 // pred_check
          %p97 = pneg %p32
        $region26: #{tpu_custom_call.1} parent=23 // pred_check_branch
          %99 = sbr.rel (%p97) target = $region28
        $region27: #{tpu_custom_call.1} parent=23 // pred_region
          %100 = dma.done [#allocation3], 256
        $region28: #{tpu_custom_call.1} parent=23 // pred_fallthru
          _
        %p101 = pneg %p32
        %p102 = pneg %p29
        %p103 = pneg %p58
        %p104 = pneg %p55
        %s105 = sand.u32 %s45, 1
        %s106 = scalar_lea.sflag [#allocation4], %s105
        %s107 = sand.u32 %s45, 1
        %s108 = smul.addr %s107, 8
        %s109 = scalar_lea.vmem [#allocation5], %s108
        %s110 = smul.u32 %s16, 8
        %s111 = scalar_lea.vmem [#allocation2], %s110
        %v112 = vld [vmem:[%s111] sm:$0xff]
        %v113 = vld [vmem:[#allocation2] sm:$0xff]
        %v114 = vld [vmem:[#allocation2 + $0x8] sm:$0xff]
        %vm115 = vcmask 261120
        %v117 = vsel %vm115, %v112, 0
        %v120 = vsel %vm115, %v113, 0
        %v123 = vsel %vm115, %v114, 0
        %125 = vmatprep.subr.mxu0 0.0
        %126 = vmatpush1.xpose.msra.mxu0 %v120
        %127 = vmatprep.subr.mxu0 0.0
        %128 = vmatpush1.xpose.msra.mxu0 %v123
        %129 = vmatprep.subr.mxu0 0.0
        %130 = vmatpush1.xpose.msra.mxu0 0.0
        %131 = vmatprep.subr.mxu0 0.0
        %132 = vmatpush1.xpose.msra.mxu0 0.0
        %133 = vmatprep.subr.mxu0 0.0
        %134 = vmatpush1.xpose.msra.mxu0 0.0
        %135 = vmatprep.subr.mxu0 0.0
        %136 = vmatpush1.xpose.msra.mxu0 0.0
        %137 = vmatprep.subr.mxu0 0.0
        %138 = vmatpush1.xpose.msra.mxu0 0.0
        %139 = vmatprep.subr.mxu0 0.0
        %140 = vmatpush1.xpose.msra.mxu0 0.0
        %141 = vmatprep.subr.mxu0 0.0
        %142 = vmatpush1.xpose.msra.mxu0 0.0
        %143 = vmatprep.subr.mxu0 0.0
        %144 = vmatpush1.xpose.msra.mxu0 0.0
        %145 = vmatprep.subr.mxu0 0.0
        %146 = vmatpush1.xpose.msra.mxu0 0.0
        %147 = vmatprep.subr.mxu0 0.0
        %148 = vmatpush1.xpose.msra.mxu0 0.0
        %149 = vmatprep.subr.mxu0 0.0
        %150 = vmatpush1.xpose.msra.mxu0 0.0
        %151 = vmatprep.subr.mxu0 0.0
        %152 = vmatpush1.xpose.msra.mxu0 0.0
        %153 = vmatprep.subr.mxu0 0.0
        %154 = vmatpush1.xpose.msra.mxu0 0.0
        %155 = vmatprep.subr.mxu0 0.0
        %156 = vmatpush1.xpose.msra.mxu0 0.0
        %157 = vmatprep.subr.mxu0 0.0
        %158 = vmatpush1.xpose.msra.mxu0 0.0
        %159 = vmatprep.subr.mxu0 0.0
        %160 = vmatpush1.xpose.msra.mxu0 0.0
        %161 = vmatprep.subr.mxu0 0.0
        %162 = vmatpush1.xpose.msra.mxu0 0.0
        %163 = vmatprep.subr.mxu0 0.0
        %164 = vmatpush1.xpose.msra.mxu0 0.0
        %165 = vmatprep.subr.mxu0 0.0
        %166 = vmatpush1.xpose.msra.mxu0 0.0
        %167 = vmatprep.subr.mxu0 0.0
        %168 = vmatpush1.xpose.msra.mxu0 0.0
        %169 = vmatprep.subr.mxu0 0.0
        %170 = vmatpush1.xpose.msra.mxu0 0.0
        %171 = vmatprep.subr.mxu0 0.0
        %172 = vmatpush1.xpose.msra.mxu0 0.0
        %173 = vmatprep.subr.mxu0 0.0
        %174 = vmatpush1.xpose.msra.mxu0 0.0
        %175 = vmatprep.subr.mxu0 0.0
        %176 = vmatpush1.xpose.msra.mxu0 0.0
        %177 = vmatprep.subr.mxu0 0.0
        %178 = vmatpush1.xpose.msra.mxu0 0.0
        %179 = vmatprep.subr.mxu0 0.0
        %180 = vmatpush1.xpose.msra.mxu0 0.0
        %181 = vmatprep.subr.mxu0 0.0
        %182 = vmatpush1.xpose.msra.mxu0 0.0
        %183 = vmatprep.subr.mxu0 0.0
        %184 = vmatpush1.xpose.msra.mxu0 0.0
        %185 = vmatprep.subr.mxu0 0.0
        %186 = vmatpush1.xpose.msra.mxu0 0.0
        %187 = vmatprep.subr.mxu0 0.0
        %188 = vmatpush1.xpose.msra.mxu0 0.0
        %189 = vmatprep.mubr.f32.mxu0 0.0
        %190 = vmatmul.mubr.f32.gmra.mrb[0].mxu0 %v117
        %v191 = vpop.f32.mrb[0].mxu0
        %v192 = vadd.f32 0.0, %v191
        %v193 = vpop.f32.mrb[0].mxu0
        %194 = vdwg.mxu0
        %v195 = vsub.f32 %v192, 1.0
        %v196 = vmul.f32 %v195, 2.0
        %v197 = vmul.f32 %v196, 1.442695
        %v198 = vpow.pop %v197
        %vm199 = vcmask 130048
        %v200 = vsel %vm199, %v198, 0.0
        %201 = vadd.xlane.f32.xlu0 %v200
        %v202 = vpop.xlane.xlu0 %201
        %v203 = vmul.f32 %v112, %v112
        %v204 = vsel %vm115, %v203, 0.0
        %205 = vadd.xlane.f32.xlu0 %v204
        %v206 = vpop.xlane.xlu0 %205
        %v207 = vsub.f32 %v206, 1.0
        %v208 = vmul.f32 %v207, 2.0
        %v209 = vmul.f32 %v208, 1.442695
        %v210 = vpow.pop %v209
        %v211 = vsub.f32 %v202, %v210
        %v212 = vsub.f32 %v211, 1.0826823
        %v213 = vlog2.pop %v212
        %v214 = vmul.f32 %v213, 0.6931472
        %v215 = vadd.f32 %v214, 2.0
        %s216 = sadd.s32 %s16, 1
        %p217 = scmp.lt.s32.totalorder %s216, 0
        %s218 = ssub.s32 0, %s216
        %s219 = scalar_select %p217, %s218, %s216
        %s220 = sand.u32 %s219, 1
        %s221 = ssub.s32 0, %s220
        %s222 = scalar_select %p217, %s221, %s220
        %p223 = scmp.ne.s32.totalorder %s222, 0
        %p224 = scmp.lt.s32.totalorder %s222, 0
        %p225 = pnand %p224, %p223
        %p226 = pneg %p225
        %s227 = sadd.s32 %s222, 2
        %s228 = scalar_select %p226, %s227, %s222
        %s229 = smul.u32 %s228, 8
        %s230 = scalar_lea.vmem [#allocation2], %s229
        %v231 = vld [vmem:[%s230] sm:$0xff]
        %v232 = vmul.f32 %v112, %v231
        %v233 = vsel %vm115, %v232, 0.0
        %234 = vadd.xlane.f32.xlu0 %v233
        %v235 = vpop.xlane.xlu0 %234
        %v236 = vmul.f32 %v235, 2.0
        %v237 = vsub.f32 %v215, %v236
        %v238 = vlaneseq
        %v239 = vshrl.u32 %v238, 7
        %v240 = vstv %s110
        %v241 = vadd.s32 %v240, %v239
        %vm242 = vcmp.lt.s32.totalorder %v241, 4
        %vm243 = vcmp.ge.s32.totalorder %v241, 8
        %vm244 = vcmp.lt.s32.totalorder %v241, 12
        %vm245 = vmand %vm243, %vm244
        %vm246 = vmor %vm242, %vm245
        %v247 = vsel %vm246, %v237, 0.0
        %vm248 = vcmask 7168
        %v249 = vsel %vm248, %v247, 0.0
        %250 = vadd.xlane.f32.xlu0 %v249
        %v251 = vpop.xlane.xlu0 %250
        %v252 = vrot.slane %v251, 4
        %v253 = vadd.f32 %v251, %v252
        %v254 = vrot.slane %v253, 2
        %v255 = vadd.f32 %v253, %v254
        %v256 = vrot.slane %v255, 1
        %v257 = vadd.f32 %v255, %v256
        %s258 = vtos %v257
        %v259 = vstv %s258
        %260 = vst [vmem:[%s109] sm:$0xff] %v259
        %s261 = sand.u32 %s45, 1
        %s262 = scalar_lea.sflag [#allocation4], %s261
        %s263 = sand.u32 %s45, 1
        %s264 = smul.addr %s263, 8
        %s265 = scalar_lea.vmem [#allocation5], %s264
        // Predicated region
        $region29: #{tpu_custom_call.1} parent=23 // pred_check
          %p266 = pneg %p55
        $region30: #{tpu_custom_call.1} parent=23 // pred_check_branch
          %268 = sbr.rel (%p266) target = $region32
        $region31: #{tpu_custom_call.1} parent=23 // pred_region
          %s270 = ssub.s32 128, 128
          %271 = vsyncadd %s262, %s270
          %s272 = smul.addr %s16, 128
          %s273 = scalar_lea.hbm %s1, %s272
          %s275 = sshll.u32 %s265, 4
          %s276 = int_to_ptr.vmem [resolvable:$true] %s275
          %278 = dma.vmem_to_hbm [thread:$0]  %s276, 128, %s273, %s262
        $region32: #{tpu_custom_call.1} parent=23 // pred_fallthru
          _
      $region24: #{tpu_custom_call.1} parent=5 // pred_fallthru
        _
      %p279 = scmp.le.s32.totalorder 2, %s11
      // Predicated region
      $region33: #{tpu_custom_call.1} parent=5 // pred_check
        %p280 = pneg %p279
      $region34: #{tpu_custom_call.1} parent=5 // pred_check_branch
        %282 = sbr.rel (%p280) target = $region36
      $region35: #{tpu_custom_call.1} parent=5 // pred_region
        %s283 = ssub.s32 %s11, 2
        // Predicated region
        $region37: #{tpu_custom_call.1} parent=35 // pred_check
          %p284 = pneg %p61
        $region38: #{tpu_custom_call.1} parent=35 // pred_check_branch
          %286 = sbr.rel (%p284) target = $region40
        $region39: #{tpu_custom_call.1} parent=35 // pred_region
          %s287 = sand.u32 %s46, 1
          %s288 = scalar_lea.sflag [#allocation4], %s287
          %s289 = sand.u32 %s46, 1
          %s290 = smul.addr %s289, 8
          %s291 = scalar_lea.vmem [#allocation5], %s290
          %292 = dma.done %s288, 128
        $region40: #{tpu_custom_call.1} parent=35 // pred_fallthru
          _
      $region36: #{tpu_custom_call.1} parent=5 // pred_fallthru
        _
    $region6: #{tpu_custom_call.1} parent=1 // loop_footer
      %s15 = sadd.s32 1, %s11
    $region7: #{tpu_custom_call.1} parent=1 // loop_footer_branch
      %10 = sbr.rel target = $region3
    $region8: #{tpu_custom_call.1} parent=1 // loop_exit
      _
    %293 = vsyncpa [#allocation3], 1
    %s294 = scalar_lea.sflag [#allocation3], 1
    %295 = vsyncpa %s294, 1
    %296 = vsyncpa [#allocation4], 1
    %s297 = scalar_lea.sflag [#allocation4], 1
    %298 = vsyncpa %s297, 1

</llo_original>
